<compile_context>
chip_gen: v7x
topology: tpu7x:2x2x1
jax: 0.10.0
libtpu: 0.0.40
codegen_flags: <defaults>
</compile_context>

<pallas_src>
import jax
import jax.numpy as jnp
from jax.experimental import pallas as pl
from jax.experimental.pallas import tpu as pltpu


# ---------------------------------------------------------------------------
# Small helpers (tiling / hardware heuristics)
# ---------------------------------------------------------------------------
def _round_up(x, m):
    return ((x + m - 1) // m) * m


def _cdiv(a, b):
    return (a + b - 1) // b


def _tpu_generation():
    """Best-effort TPU generation (5/6/7); used only for tile-size heuristics."""
    try:
        kind = jax.devices()[0].device_kind.lower()
    except Exception:
        return 6
    for g in (7, 6, 5, 4):
        if f"v{g}" in kind:
            return g
    return 6


def _vmem_limit_bytes():
    """~80% of per-core VMEM, with a conservative (v7x-sized) fallback."""
    try:
        cap = pltpu.get_tpu_info().vmem_capacity_bytes
    except Exception:
        cap = 64 * 1024 * 1024
    return int(0.8 * cap)


def _block_spec(shape, index_map, *, single_buffer=False):
    """BlockSpec; grid-invariant operands get a single VMEM buffer."""
    if single_buffer:
        try:
            return pl.BlockSpec(shape, index_map, pipeline_mode=pl.Buffered(1))
        except TypeError:            # very old jax without pipeline_mode
            return pl.BlockSpec(shape, index_map)
    return pl.BlockSpec(shape, index_map)


def _choose_row_tiling(rows, target):
    """Row tile: multiple of 16 (bf16 sublane packing), near `target`,
    with minimal zero-row padding.  Returns (tm, n_tiles, rows_padded)."""
    cap = max(16, min(target, _round_up(rows, 16)))
    nt = _cdiv(rows, cap)
    tm = _round_up(_cdiv(rows, nt), 16)
    return tm, nt, nt * tm


def _choose_col_tiling(cols, target):
    """Lane tile: multiple of 128, near `target`, minimal zero-column padding.
    Returns (tn, n_tiles, cols_padded)."""
    c128 = _round_up(cols, 128)
    ng = _cdiv(c128, max(128, target))
    tn = _round_up(_cdiv(c128, ng), 128)
    return tn, ng, ng * tn


# ---------------------------------------------------------------------------
# Kernels
# ---------------------------------------------------------------------------
def _hidden_kernel(x_ref, scene_ref, bn_ref, cvec_ref,
                   w1_ref, w2a_ref, w2b_ref, out_ref):
    # Packed per-row BN affines: cols [s0, o0, s1, o1, s2, o2, 0, 0]
    bn = bn_ref[...]
    s0, o0 = bn[:, 0:1], bn[:, 1:2]
    s1, o1 = bn[:, 2:3], bn[:, 3:4]
    s2, o2 = bn[:, 4:5], bn[:, 5:6]
    # Packed per-column vectors: rows [colsum(W1), b1, b2, 0...]
    cv = cvec_ref[...]
    csum1, b1, b2 = cv[0:1, :], cv[1:2, :], cv[2:3, :]

    # fc1 with bn0 folded into the epilogue:
    #   bn0(x) @ W1 = s0 * (x @ W1) + o0 * colsum(W1)
    t1 = jnp.dot(x_ref[...], w1_ref[...], preferred_element_type=jnp.float32)
    h = s0 * t1 + o0 * csum1 + b1
    # relu(bn1(.))
    h = jnp.maximum(s1 * h + o1, 0.0)

    # fc2(concat([h, scene], -1)) == h @ W2[:h1] + scene @ W2[h1:] + b2
    t2 = (jnp.dot(h.astype(w2a_ref.dtype), w2a_ref[...],
                  preferred_element_type=jnp.float32)
          + jnp.dot(scene_ref[...], w2b_ref[...],
                    preferred_element_type=jnp.float32)
          + b2)
    # relu(bn2(.))
    out_ref[...] = jnp.maximum(s2 * t2 + o2, 0.0).astype(out_ref.dtype)


def _linear_kernel(x_ref, w_ref, b_ref, o_ref):
    o_ref[...] = (jnp.dot(x_ref[...], w_ref[...],
                          preferred_element_type=jnp.float32)
                  + b_ref[...]).astype(o_ref.dtype)


# ---------------------------------------------------------------------------
# pallas_call wrappers
# ---------------------------------------------------------------------------
def pallas_linear(x, w, b, tn, vmem_limit):
    """y = x @ w + b (f32 accumulation), tiled over the output-lane axis."""
    M, K = x.shape
    K2, N = w.shape
    assert K == K2 and N % tn == 0
    cost = pl.CostEstimate(
        flops=2 * M * K * N,
        transcendentals=0,
        bytes_accessed=int(x.size * x.dtype.itemsize
                           + w.size * w.dtype.itemsize
                           + b.size * 4 + M * N * 4),
    )
    return pl.pallas_call(
        _linear_kernel,
        out_shape=jax.ShapeDtypeStruct((M, N), jnp.float32),
        grid=(N // tn,),
        in_specs=[
            # grid-invariant LHS: single buffer
            _block_spec((M, K), lambda j: (0, 0), single_buffer=True),
            pl.BlockSpec((K, tn), lambda j: (0, j)),
            pl.BlockSpec((1, tn), lambda j: (0, j)),
        ],
        out_specs=pl.BlockSpec((M, tn), lambda j: (0, j)),
        compiler_params=pltpu.CompilerParams(
            dimension_semantics=("parallel",),
            vmem_limit_bytes=vmem_limit),
        cost_estimate=cost,
    )(x, w, b.reshape(1, N))


def _bn_affine(g, b, m, v, eps=1e-5):
    scale = g / jnp.sqrt(v + eps)
    return scale, b - m * scale


def body_dec_shift_forward(p, body_bps, scene_bps_verts_feat):
    """body_bps: (B, C, n_bps); scene_bps_verts_feat: (B, C, hsize2)."""
    B, C, n_bps = body_bps.shape
    h2 = scene_bps_verts_feat.shape[-1]
    h1 = p["w1"].shape[1]
    V3 = p["w3v"].shape[1]          # 3 * n_body_verts
    BC = B * C

    gen = _tpu_generation()
    vmem_limit = _vmem_limit_bytes()
    target_rows = 128 if gen <= 5 else 256      # fill 128- vs 256-wide MXU
    target_cols = 2048 if gen <= 5 else 4096    # fc3 lane tile (HBM-bound GEMV)

    # ---- row tiling over B*C (bf16-friendly: multiples of 16, minimal pad) --
    tm, n_row_tiles, BC_pad = _choose_row_tiling(BC, target_rows)

    def pad_rows(a):
        pad = BC_pad - a.shape[0]
        return jnp.pad(a, ((0, pad), (0, 0))) if pad else a

    x2d = pad_rows(body_bps.reshape(BC, n_bps)).astype(jnp.bfloat16)
    s2d = pad_rows(scene_bps_verts_feat.reshape(BC, h2)).astype(jnp.bfloat16)

    # per-row BN affines, packed into one (BC_pad, 8) array
    s0, o0 = _bn_affine(p["bn0_g"], p["bn0_b"], p["bn0_m"], p["bn0_v"])
    s1, o1 = _bn_affine(p["bn1_g"], p["bn1_b"], p["bn1_m"], p["bn1_v"])
    s2, o2 = _bn_affine(p["bn2_g"], p["bn2_b"], p["bn2_m"], p["bn2_v"])

    def rowify(per_channel):        # (C,) -> (BC_pad,), row index = b*C + c
        r = jnp.tile(per_channel, (B,))
        return jnp.pad(r, (0, BC_pad - BC)) if BC_pad > BC else r

    # NOTE: zero padding on the scale/offset columns makes padded rows emit
    # exact zeros through both relu epilogues (they are sliced off anyway).
    zeros = jnp.zeros((BC_pad,), jnp.float32)
    bn_pack = jnp.stack([rowify(s0), rowify(o0), rowify(s1), rowify(o1),
                         rowify(s2), rowify(o2), zeros, zeros], axis=1)

    w1 = p["w1"].astype(jnp.bfloat16)
    w2a = p["w2"][:h1].astype(jnp.bfloat16)
    w2b = p["w2"][h1:].astype(jnp.bfloat16)

    # per-column vectors packed into one (8, h1) array: colsum(W1), b1, b2.
    # colsum is taken from the bf16-rounded W1 so the bn0 fold matches the
    # in-kernel matmul's rounding of W1.
    cvec = jnp.zeros((8, h1), jnp.float32)
    cvec = cvec.at[0].set(jnp.sum(w1.astype(jnp.float32), axis=0))
    cvec = cvec.at[1].set(p["b1"])
    cvec = cvec.at[2].set(p["b2"])

    hidden_cost = pl.CostEstimate(
        flops=2 * BC_pad * h1 * (n_bps + h1 + h2),
        transcendentals=0,
        bytes_accessed=int(x2d.size * 2 + s2d.size * 2
                           + bn_pack.size * 4 + cvec.size * 4
                           + (w1.size + w2a.size + w2b.size) * 2
                           + BC_pad * h1 * 2),
    )

    hidden = pl.pallas_call(
        _hidden_kernel,
        out_shape=jax.ShapeDtypeStruct((BC_pad, h1), jnp.bfloat16),
        grid=(n_row_tiles,),
        in_specs=[
            pl.BlockSpec((tm, n_bps), lambda i: (i, 0)),
            pl.BlockSpec((tm, h2), lambda i: (i, 0)),
            pl.BlockSpec((tm, 8), lambda i: (i, 0)),
            # grid-invariant operands: single VMEM buffer (DMA'd once)
            _block_spec((8, h1), lambda i: (0, 0), single_buffer=True),
            _block_spec((n_bps, h1), lambda i: (0, 0), single_buffer=True),
            _block_spec((h1, h1), lambda i: (0, 0), single_buffer=True),
            _block_spec((h2, h1), lambda i: (0, 0), single_buffer=True),
        ],
        out_specs=pl.BlockSpec((tm, h1), lambda i: (i, 0)),
        compiler_params=pltpu.CompilerParams(
            dimension_semantics=("parallel",),
            vmem_limit_bytes=vmem_limit),
        cost_estimate=hidden_cost,
    )(x2d, s2d, bn_pack, cvec, w1, w2a, w2b)

    flat = hidden[:BC].reshape(B, C * h1)                # x.view(B, -1), bf16

    # ---- fused output projection: [fc3_verts | fc3_shift], zero-padded ------
    N_out = V3 + 3
    K_out = C * h1
    # Cap tn so the double-buffered bf16 weight block uses <= ~1/3 of VMEM.
    tn_cap = max(128, ((vmem_limit // 3) // (4 * K_out)) // 128 * 128)
    tn, _, N_pad = _choose_col_tiling(N_out, min(target_cols, tn_cap))

    w_out = jnp.concatenate([p["w3v"], p["w3s"]], axis=1)
    b_out = jnp.concatenate([p["b3v"], p["b3s"]])
    if N_pad > N_out:
        w_out = jnp.pad(w_out, ((0, 0), (0, N_pad - N_out)))
        b_out = jnp.pad(b_out, (0, N_pad - N_out))
    w_out = w_out.astype(jnp.bfloat16)

    out = pallas_linear(flat, w_out, b_out, tn=tn, vmem_limit=vmem_limit)

    body_rec = out[:, :V3].reshape(B, 3, V3 // 3)        # view(-1, 3, n_body_verts)
    shift = out[:, V3:N_out]
    return body_rec, shift


# ---------------------------------------------------------------------------
# Pure-JAX reference for verification
# ---------------------------------------------------------------------------
def reference_forward(p, body_bps, scene_feat):
    eps = 1e-5

    def bn(x, g, b, m, v):   # x: (B, C, L), params per-channel (C,)
        return ((x - m[None, :, None]) / jnp.sqrt(v[None, :, None] + eps)
                * g[None, :, None] + b[None, :, None])

    x = bn(body_bps, p["bn0_g"], p["bn0_b"], p["bn0_m"], p["bn0_v"])
    x = x @ p["w1"] + p["b1"]
    x = jax.nn.relu(bn(x, p["bn1_g"], p["bn1_b"], p["bn1_m"], p["bn1_v"]))
    x = jnp.concatenate([x, scene_feat], axis=-1)
    x = x @ p["w2"] + p["b2"]
    x = jax.nn.relu(bn(x, p["bn2_g"], p["bn2_b"], p["bn2_m"], p["bn2_v"]))
    flat = x.reshape(x.shape[0], -1)
    body_rec = (flat @ p["w3v"] + p["b3v"]).reshape(-1, 3, p["w3v"].shape[1] // 3)
    shift = flat @ p["w3s"] + p["b3s"]
    return body_rec, shift


# ---------------------------------------------------------------------------
# Deterministic parameter init (PyTorch-style Linear init, synthetic BN stats)
# ---------------------------------------------------------------------------
def init_params(key, n_bps, n_bps_feat, h1, h2, n_body_verts):
    ks = list(jax.random.split(key, 16))

    def linear(k, fan_in, fan_out):
        k1, k2 = jax.random.split(k)
        bound = 1.0 / (fan_in ** 0.5)
        w = jax.random.uniform(k1, (fan_in, fan_out), jnp.float32, -bound, bound)
        b = jax.random.uniform(k2, (fan_out,), jnp.float32, -bound, bound)
        return w, b

    def bn(k, c):
        k1, k2, k3, k4 = jax.random.split(k, 4)
        return dict(
            g=jax.random.uniform(k1, (c,), jnp.float32, 0.5, 1.5),
            b=jax.random.uniform(k2, (c,), jnp.float32, -0.1, 0.1),
            m=0.1 * jax.random.normal(k3, (c,), jnp.float32),
            v=jax.random.uniform(k4, (c,), jnp.float32, 0.5, 1.5),
        )

    p = {}
    for i, name in enumerate(["bn0", "bn1", "bn2"]):
        d = bn(ks[i], n_bps_feat)
        p[f"{name}_g"], p[f"{name}_b"] = d["g"], d["b"]
        p[f"{name}_m"], p[f"{name}_v"] = d["m"], d["v"]
    p["w1"], p["b1"] = linear(ks[3], n_bps, h1)
    p["w2"], p["b2"] = linear(ks[4], h1 + h2, h1)
    p["w3v"], p["b3v"] = linear(ks[5], n_bps_feat * h1, n_body_verts * 3)
    p["w3s"], p["b3s"] = linear(ks[6], n_bps_feat * h1, 3)
    return p


if __name__ == "__main__":
    # Small shapes consistent with the module (rec_goal='body_verts').
    B, C = 2, 1                  # batch, n_bps_feat
    n_bps, h1, h2 = 256, 128, 128
    n_body_verts = 128

    key = jax.random.PRNGKey(0)
    kp, kx, ksc = jax.random.split(key, 3)
    params = init_params(kp, n_bps, C, h1, h2, n_body_verts)

    body_bps = jax.random.normal(kx, (B, C, n_bps), jnp.float32)
    scene_bps_verts_feat = jax.random.normal(ksc, (B, C, h2), jnp.float32)

    body_rec, shift = body_dec_shift_forward(params, body_bps, scene_bps_verts_feat)
    jax.block_until_ready((body_rec, shift))

    ref_rec, ref_shift = reference_forward(params, body_bps, scene_bps_verts_feat)
    assert body_rec.shape == (B, 3, n_body_verts), body_rec.shape
    assert shift.shape == (B, 3), shift.shape
    assert jnp.allclose(body_rec, ref_rec, rtol=5e-2, atol=5e-2)
    assert jnp.allclose(shift, ref_shift, rtol=5e-2, atol=5e-2)

    print("KERNEL_OK")
</pallas_src>

<mosaic_0001>
module attributes {stable_mosaic.version = 11 : i64} {
  func.func @_hidden_kernel(%arg0: i32, %arg1: memref<16x256xbf16, #tpu.memory_space<vmem>>, %arg2: memref<16x128xbf16, #tpu.memory_space<vmem>>, %arg3: memref<16x8xf32, #tpu.memory_space<vmem>>, %arg4: memref<8x128xf32, #tpu.memory_space<vmem>>, %arg5: memref<256x128xbf16, #tpu.memory_space<vmem>>, %arg6: memref<128x128xbf16, #tpu.memory_space<vmem>>, %arg7: memref<128x128xbf16, #tpu.memory_space<vmem>>, %arg8: memref<16x128xbf16, #tpu.memory_space<vmem>>) attributes {dimension_semantics = [#tpu.dimension_semantics<parallel>], iteration_bounds = array<i64: 1>, scalar_prefetch = 0 : i64, scratch_operands = 0 : i64, tpu.core_type = #tpu.core_type<tc>, window_params = [{transform_indices = @transform_0, window_bounds = array<i64: 16, 256>}, {transform_indices = @transform_1, window_bounds = array<i64: 16, 128>}, {transform_indices = @transform_2, window_bounds = array<i64: 16, 8>}, {pipeline_mode = #tpu.pipeline_mode<synchronous>, transform_indices = @transform_3, window_bounds = array<i64: 8, 128>}, {pipeline_mode = #tpu.pipeline_mode<synchronous>, transform_indices = @transform_4, window_bounds = array<i64: 256, 128>}, {pipeline_mode = #tpu.pipeline_mode<synchronous>, transform_indices = @transform_5, window_bounds = array<i64: 128, 128>}, {pipeline_mode = #tpu.pipeline_mode<synchronous>, transform_indices = @transform_6, window_bounds = array<i64: 128, 128>}, {transform_indices = @transform_7, window_bounds = array<i64: 16, 128>}]} {
    %c0 = arith.constant 0 : index
    %c0_0 = arith.constant 0 : index
    %0 = vector.load %arg3[%c0, %c0_0] : memref<16x8xf32, #tpu.memory_space<vmem>>, vector<16x8xf32>
    %1 = vector.extract_strided_slice %0 {offsets = [0, 0], sizes = [16, 1], strides = [1, 1]} : vector<16x8xf32> to vector<16x1xf32>
    %2 = vector.extract_strided_slice %0 {offsets = [0, 1], sizes = [16, 1], strides = [1, 1]} : vector<16x8xf32> to vector<16x1xf32>
    %3 = vector.extract_strided_slice %0 {offsets = [0, 2], sizes = [16, 1], strides = [1, 1]} : vector<16x8xf32> to vector<16x1xf32>
    %4 = vector.extract_strided_slice %0 {offsets = [0, 3], sizes = [16, 1], strides = [1, 1]} : vector<16x8xf32> to vector<16x1xf32>
    %5 = vector.extract_strided_slice %0 {offsets = [0, 4], sizes = [16, 1], strides = [1, 1]} : vector<16x8xf32> to vector<16x1xf32>
    %6 = vector.extract_strided_slice %0 {offsets = [0, 5], sizes = [16, 1], strides = [1, 1]} : vector<16x8xf32> to vector<16x1xf32>
    %c0_1 = arith.constant 0 : index
    %c0_2 = arith.constant 0 : index
    %7 = vector.load %arg4[%c0_1, %c0_2] : memref<8x128xf32, #tpu.memory_space<vmem>>, vector<8x128xf32>
    %8 = vector.extract_strided_slice %7 {offsets = [0, 0], sizes = [1, 128], strides = [1, 1]} : vector<8x128xf32> to vector<1x128xf32>
    %9 = vector.extract_strided_slice %7 {offsets = [1, 0], sizes = [1, 128], strides = [1, 1]} : vector<8x128xf32> to vector<1x128xf32>
    %10 = vector.extract_strided_slice %7 {offsets = [2, 0], sizes = [1, 128], strides = [1, 1]} : vector<8x128xf32> to vector<1x128xf32>
    %c0_3 = arith.constant 0 : index
    %c0_4 = arith.constant 0 : index
    %11 = vector.load %arg1[%c0_3, %c0_4] : memref<16x256xbf16, #tpu.memory_space<vmem>>, vector<16x256xbf16>
    %c0_5 = arith.constant 0 : index
    %c0_6 = arith.constant 0 : index
    %12 = vector.load %arg5[%c0_5, %c0_6] : memref<256x128xbf16, #tpu.memory_space<vmem>>, vector<256x128xbf16>
    %cst = arith.constant dense<0.000000e+00> : vector<16x128xf32>
    %13 = tpu.matmul %11, %12, %cst {dimension_numbers = #tpu.dot_dimension_numbers<[1], [0], [0], [1], [0, 0, 1, 1], [], []>} : vector<16x256xbf16>, vector<256x128xbf16>, vector<16x128xf32> -> vector<16x128xf32>
    %14 = vector.broadcast %1 : vector<16x1xf32> to vector<16x128xf32>
    %15 = arith.mulf %14, %13 : vector<16x128xf32>
    %16 = vector.broadcast %2 : vector<16x1xf32> to vector<16x128xf32>
    %17 = vector.broadcast %8 : vector<1x128xf32> to vector<16x128xf32>
    %18 = arith.mulf %16, %17 : vector<16x128xf32>
    %19 = arith.addf %15, %18 : vector<16x128xf32>
    %20 = vector.broadcast %9 : vector<1x128xf32> to vector<16x128xf32>
    %21 = arith.addf %19, %20 : vector<16x128xf32>
    %22 = vector.broadcast %3 : vector<16x1xf32> to vector<16x128xf32>
    %23 = arith.mulf %22, %21 : vector<16x128xf32>
    %24 = vector.broadcast %4 : vector<16x1xf32> to vector<16x128xf32>
    %25 = arith.addf %23, %24 : vector<16x128xf32>
    %cst_7 = arith.constant 0.000000e+00 : f32
    %26 = vector.broadcast %cst_7 : f32 to vector<16x128xf32>
    %27 = arith.maximumf %25, %26 : vector<16x128xf32>
    %28 = arith.truncf %27 : vector<16x128xf32> to vector<16x128xbf16>
    %c0_8 = arith.constant 0 : index
    %c0_9 = arith.constant 0 : index
    %29 = vector.load %arg6[%c0_8, %c0_9] : memref<128x128xbf16, #tpu.memory_space<vmem>>, vector<128x128xbf16>
    %cst_10 = arith.constant dense<0.000000e+00> : vector<16x128xf32>
    %30 = tpu.matmul %28, %29, %cst_10 {dimension_numbers = #tpu.dot_dimension_numbers<[1], [0], [0], [1], [0, 0, 1, 1], [], []>} : vector<16x128xbf16>, vector<128x128xbf16>, vector<16x128xf32> -> vector<16x128xf32>
    %c0_11 = arith.constant 0 : index
    %c0_12 = arith.constant 0 : index
    %31 = vector.load %arg2[%c0_11, %c0_12] : memref<16x128xbf16, #tpu.memory_space<vmem>>, vector<16x128xbf16>
    %c0_13 = arith.constant 0 : index
    %c0_14 = arith.constant 0 : index
    %32 = vector.load %arg7[%c0_13, %c0_14] : memref<128x128xbf16, #tpu.memory_space<vmem>>, vector<128x128xbf16>
    %cst_15 = arith.constant dense<0.000000e+00> : vector<16x128xf32>
    %33 = tpu.matmul %31, %32, %cst_15 {dimension_numbers = #tpu.dot_dimension_numbers<[1], [0], [0], [1], [0, 0, 1, 1], [], []>} : vector<16x128xbf16>, vector<128x128xbf16>, vector<16x128xf32> -> vector<16x128xf32>
    %34 = arith.addf %30, %33 : vector<16x128xf32>
    %35 = vector.broadcast %10 : vector<1x128xf32> to vector<16x128xf32>
    %36 = arith.addf %34, %35 : vector<16x128xf32>
    %37 = vector.broadcast %5 : vector<16x1xf32> to vector<16x128xf32>
    %38 = arith.mulf %37, %36 : vector<16x128xf32>
    %39 = vector.broadcast %6 : vector<16x1xf32> to vector<16x128xf32>
    %40 = arith.addf %38, %39 : vector<16x128xf32>
    %cst_16 = arith.constant 0.000000e+00 : f32
    %41 = vector.broadcast %cst_16 : f32 to vector<16x128xf32>
    %42 = arith.maximumf %40, %41 : vector<16x128xf32>
    %43 = arith.truncf %42 : vector<16x128xf32> to vector<16x128xbf16>
    %c0_17 = arith.constant 0 : index
    %c0_18 = arith.constant 0 : index
    %44 = vector.load %arg8[%c0_17, %c0_18] : memref<16x128xbf16, #tpu.memory_space<vmem>>, vector<16x128xbf16>
    tpu.vector_store %arg8[%c0_17, %c0_18], %43 {strides = array<i32>} : memref<16x128xbf16, #tpu.memory_space<vmem>>, vector<16x128xbf16>,
    return
  }
  func.func @transform_0(%arg0: i32) -> (i32, i32) {
    %c0_i32 = arith.constant 0 : i32
    %c0_i32_0 = arith.constant 0 : i32
    return %arg0, %c0_i32 : i32, i32
  }
  func.func @transform_1(%arg0: i32) -> (i32, i32) {
    %c0_i32 = arith.constant 0 : i32
    %c0_i32_0 = arith.constant 0 : i32
    return %arg0, %c0_i32 : i32, i32
  }
  func.func @transform_2(%arg0: i32) -> (i32, i32) {
    %c0_i32 = arith.constant 0 : i32
    %c0_i32_0 = arith.constant 0 : i32
    return %arg0, %c0_i32 : i32, i32
  }
  func.func @transform_3(%arg0: i32) -> (i32, i32) {
    %c0_i32 = arith.constant 0 : i32
    %c0_i32_0 = arith.constant 0 : i32
    %c0_i32_1 = arith.constant 0 : i32
    return %c0_i32, %c0_i32_0 : i32, i32
  }
  func.func @transform_4(%arg0: i32) -> (i32, i32) {
    %c0_i32 = arith.constant 0 : i32
    %c0_i32_0 = arith.constant 0 : i32
    %c0_i32_1 = arith.constant 0 : i32
    return %c0_i32, %c0_i32_0 : i32, i32
  }
  func.func @transform_5(%arg0: i32) -> (i32, i32) {
    %c0_i32 = arith.constant 0 : i32
    %c0_i32_0 = arith.constant 0 : i32
    %c0_i32_1 = arith.constant 0 : i32
    return %c0_i32, %c0_i32_0 : i32, i32
  }
  func.func @transform_6(%arg0: i32) -> (i32, i32) {
    %c0_i32 = arith.constant 0 : i32
    %c0_i32_0 = arith.constant 0 : i32
    %c0_i32_1 = arith.constant 0 : i32
    return %c0_i32, %c0_i32_0 : i32, i32
  }
  func.func @transform_7(%arg0: i32) -> (i32, i32) {
    %c0_i32 = arith.constant 0 : i32
    %c0_i32_0 = arith.constant 0 : i32
    return %arg0, %c0_i32 : i32, i32
  }
}

</mosaic_0001>

<llo_original>
// kernel: tpu_custom_call.1
$region0: #{tpu_custom_call.1}
  #allocation0 [shape = 'u32[]', space=smem, size = 0x4, offset = 0x4, fixed_abs, tag = 'smem constant byte address 0x4 - core index']
  #allocation1 [shape = 'u32[144,128]{1,0:T(1,128)}', space=vmem, size = 0x12000, scoped, tag = 'internal scratch']
  %s0 = inlined_call_operand.vmem [shape: bf16[16,256], index: 0, kind: input, shape index: {}]
  %s1 = inlined_call_operand.vmem [shape: bf16[16,128], index: 1, kind: input, shape index: {}]
  %s2 = inlined_call_operand.vmem [shape: f32[16,8], index: 2, kind: input, shape index: {}]
  %s3 = inlined_call_operand.vmem [shape: f32[8,128], index: 3, kind: input, shape index: {}]
  %s4 = inlined_call_operand.hbm [shape: bf16[256,128], index: 4, kind: input, shape index: {}]
  %s5 = inlined_call_operand.hbm [shape: bf16[128,128], index: 5, kind: input, shape index: {}]
  %s6 = inlined_call_operand.hbm [shape: bf16[128,128], index: 6, kind: input, shape index: {}]
  %s7 = inlined_call_operand.hbm [shape: bf16[16,128], index: 7, kind: output, shape index: {}]
  %s8 = sld [smem:[#allocation0]]
  $region50: #{tpu_custom_call.1} parent=0
    _
  %s10 = ssub.s32 1, %s8
  %s11 = scalar_select 0, %s10, %s8
  $region1: #{tpu_custom_call.1} parent=0
    #allocation2 [shape = 'u8[65536]{0}', space=vmem, size = 0x10000, scoped, tag = 'input window, operand 4, single buffered']
    #allocation3 [shape = 's32[1]{0}', space=sflag, size = 0x4, scoped, tag = 'scoped memory for tpu_custom_call.1']
    #allocation4 [shape = 's32[1]{0}', space=sflag, size = 0x4, scoped, tag = 'scoped memory for tpu_custom_call.1']
    #allocation5 [shape = 'u8[32768]{0}', space=vmem, size = 0x8000, scoped, tag = 'input window, operand 5, single buffered']
    #allocation6 [shape = 's32[1]{0}', space=sflag, size = 0x4, scoped, tag = 'scoped memory for tpu_custom_call.1']
    #allocation7 [shape = 'u8[32768]{0}', space=vmem, size = 0x8000, scoped, tag = 'input window, operand 6, single buffered']
    #allocation8 [shape = 'u8[4096]{0}', space=vmem, size = 0x1000, scoped, tag = 'output window, operand 0, single buffered']
    %12 = vsyncpa [#allocation3], 0
    %13 = vsyncpa [#allocation6], 0
    %14 = vsyncpa [#allocation4], 0
    // Predicated region
    $region2: #{tpu_custom_call.1} parent=1 // pred_check
      _
    $region3: #{tpu_custom_call.1} parent=1 // pred_check_branch
      %16 = sbr.rel (0) target = $region5
    $region4: #{tpu_custom_call.1} parent=1 // pred_region
      _
    $region5: #{tpu_custom_call.1} parent=1 // pred_fallthru
      _
    // Predicated region
    $region6: #{tpu_custom_call.1} parent=1 // pred_check
      _
    $region7: #{tpu_custom_call.1} parent=1 // pred_check_branch
      %18 = sbr.rel (0) target = $region9
    $region8: #{tpu_custom_call.1} parent=1 // pred_region
      _
    $region9: #{tpu_custom_call.1} parent=1 // pred_fallthru
      _
    // Predicated region
    $region10: #{tpu_custom_call.1} parent=1 // pred_check
      _
    $region11: #{tpu_custom_call.1} parent=1 // pred_check_branch
      %20 = sbr.rel (0) target = $region13
    $region12: #{tpu_custom_call.1} parent=1 // pred_region
      _
    $region13: #{tpu_custom_call.1} parent=1 // pred_fallthru
      _
    // Predicated region
    $region14: #{tpu_custom_call.1} parent=1 // pred_check
      _
    $region15: #{tpu_custom_call.1} parent=1 // pred_check_branch
      %22 = sbr.rel (0) target = $region17
    $region16: #{tpu_custom_call.1} parent=1 // pred_region
      _
    $region17: #{tpu_custom_call.1} parent=1 // pred_fallthru
      _
    // Predicated region
    $region18: #{tpu_custom_call.1} parent=1 // pred_check
      _
    $region19: #{tpu_custom_call.1} parent=1 // pred_check_branch
      %24 = sbr.rel (0) target = $region21
    $region20: #{tpu_custom_call.1} parent=1 // pred_region
      %s26 = ssub.s32 2048, 2048
      %27 = vsyncadd [#allocation3], %s26
      %s28 = sshll.u32 [#allocation2], 4
      %s29 = int_to_ptr.vmem [resolvable:$true] %s28
      %34 = dma.hbm_to_vmem [thread:$0]  %s4, 2048, %s29, [#allocation3], 64, 64, 4
    $region21: #{tpu_custom_call.1} parent=1 // pred_fallthru
      _
    // Predicated region
    $region22: #{tpu_custom_call.1} parent=1 // pred_check
      _
    $region23: #{tpu_custom_call.1} parent=1 // pred_check_branch
      %36 = sbr.rel (0) target = $region25
    $region24: #{tpu_custom_call.1} parent=1 // pred_region
      %s38 = ssub.s32 1024, 1024
      %39 = vsyncadd [#allocation6], %s38
      %s40 = sshll.u32 [#allocation5], 4
      %s41 = int_to_ptr.vmem [resolvable:$true] %s40
      %46 = dma.hbm_to_vmem [thread:$0]  %s5, 1024, %s41, [#allocation6], 64, 64, 4
    $region25: #{tpu_custom_call.1} parent=1 // pred_fallthru
      _
    // Predicated region
    $region26: #{tpu_custom_call.1} parent=1 // pred_check
      _
    $region27: #{tpu_custom_call.1} parent=1 // pred_check_branch
      %48 = sbr.rel (0) target = $region29
    $region28: #{tpu_custom_call.1} parent=1 // pred_region
      %s50 = ssub.s32 1024, 1024
      %51 = vsyncadd [#allocation6], %s50
      %s52 = sshll.u32 [#allocation7], 4
      %s53 = int_to_ptr.vmem [resolvable:$true] %s52
      %58 = dma.hbm_to_vmem [thread:$0]  %s6, 1024, %s53, [#allocation6], 64, 64, 4
    $region29: #{tpu_custom_call.1} parent=1 // pred_fallthru
      _
    // Predicated region
    $region30: #{tpu_custom_call.1} parent=1 // pred_check
      _
    $region31: #{tpu_custom_call.1} parent=1 // pred_check_branch
      %60 = sbr.rel (0) target = $region33
    $region32: #{tpu_custom_call.1} parent=1 // pred_region
      %61 = dma.done [#allocation3], 2048
    $region33: #{tpu_custom_call.1} parent=1 // pred_fallthru
      _
    // Predicated region
    $region34: #{tpu_custom_call.1} parent=1 // pred_check
      _
    $region35: #{tpu_custom_call.1} parent=1 // pred_check_branch
      %63 = sbr.rel (0) target = $region37
    $region36: #{tpu_custom_call.1} parent=1 // pred_region
      %64 = dma.done [#allocation6], 1024
    $region37: #{tpu_custom_call.1} parent=1 // pred_fallthru
      _
    // Predicated region
    $region38: #{tpu_custom_call.1} parent=1 // pred_check
      _
    $region39: #{tpu_custom_call.1} parent=1 // pred_check_branch
      %66 = sbr.rel (0) target = $region41
    $region40: #{tpu_custom_call.1} parent=1 // pred_region
      %67 = dma.done [#allocation6], 1024
    $region41: #{tpu_custom_call.1} parent=1 // pred_fallthru
      _
    %v69 = vld [vmem:[%s2] sm:$0xff]
    %v70 = vld [vmem:[%s2 + $0x8] sm:$0xff]
    %v71 = vld [vmem:[%s3] sm:$0xff]
    %v72 = vld [vmem:[%s0] sm:$0xff]
    %v73 = vld [vmem:[%s0 + $0x8] sm:$0xff]
    %v74 = vld [vmem:[#allocation2] sm:$0xf]
    %v75 = vld [vmem:[#allocation2 + $0x4] sm:$0xf]
    %v76 = vld [vmem:[#allocation2 + $0x8] sm:$0xf]
    %v77 = vld [vmem:[#allocation2 + $0xc] sm:$0xf]
    %v78 = vld [vmem:[#allocation2 + $0x10] sm:$0xf]
    %v79 = vld [vmem:[#allocation2 + $0x14] sm:$0xf]
    %v80 = vld [vmem:[#allocation2 + $0x18] sm:$0xf]
    %v81 = vld [vmem:[#allocation2 + $0x1c] sm:$0xf]
    %v82 = vld [vmem:[#allocation2 + $0x20] sm:$0xf]
    %v83 = vld [vmem:[#allocation2 + $0x24] sm:$0xf]
    %v84 = vld [vmem:[#allocation2 + $0x28] sm:$0xf]
    %v85 = vld [vmem:[#allocation2 + $0x2c] sm:$0xf]
    %v86 = vld [vmem:[#allocation2 + $0x30] sm:$0xf]
    %v87 = vld [vmem:[#allocation2 + $0x34] sm:$0xf]
    %v88 = vld [vmem:[#allocation2 + $0x38] sm:$0xf]
    %v89 = vld [vmem:[#allocation2 + $0x3c] sm:$0xf]
    %v90 = vld [vmem:[#allocation2 + $0x40] sm:$0xf]
    %v91 = vld [vmem:[#allocation2 + $0x44] sm:$0xf]
    %v92 = vld [vmem:[#allocation2 + $0x48] sm:$0xf]
    %v93 = vld [vmem:[#allocation2 + $0x4c] sm:$0xf]
    %v94 = vld [vmem:[#allocation2 + $0x50] sm:$0xf]
    %v95 = vld [vmem:[#allocation2 + $0x54] sm:$0xf]
    %v96 = vld [vmem:[#allocation2 + $0x58] sm:$0xf]
    %v97 = vld [vmem:[#allocation2 + $0x5c] sm:$0xf]
    %v98 = vld [vmem:[#allocation2 + $0x60] sm:$0xf]
    %v99 = vld [vmem:[#allocation2 + $0x64] sm:$0xf]
    %v100 = vld [vmem:[#allocation2 + $0x68] sm:$0xf]
    %v101 = vld [vmem:[#allocation2 + $0x6c] sm:$0xf]
    %v102 = vld [vmem:[#allocation2 + $0x70] sm:$0xf]
    %v103 = vld [vmem:[#allocation2 + $0x74] sm:$0xf]
    %v104 = vld [vmem:[#allocation2 + $0x78] sm:$0xf]
    %v105 = vld [vmem:[#allocation2 + $0x7c] sm:$0xf]
    %v108 = vunpack.c.l.b16 %v72
    %v109 = vunpack.c.h.b16 %v72
    %v110 = vunpack.c.l.b16 %v73
    %v111 = vunpack.c.h.b16 %v73
    %v112 = vpack.c.b16 %v110, %v108
    %v113 = vpack.c.b16 %v111, %v109
    %v148 = vunpack.c.l.b16 %v74
    %v149 = vunpack.c.l.b16 %v75
    %v150 = vunpack.c.l.b16 %v76
    %v151 = vunpack.c.l.b16 %v77
    %v152 = vunpack.c.l.b16 %v78
    %v153 = vunpack.c.l.b16 %v79
    %v154 = vunpack.c.l.b16 %v80
    %v155 = vunpack.c.l.b16 %v81
    %v156 = vunpack.c.l.b16 %v82
    %v157 = vunpack.c.l.b16 %v83
    %v158 = vunpack.c.l.b16 %v84
    %v159 = vunpack.c.l.b16 %v85
    %v160 = vunpack.c.l.b16 %v86
    %v161 = vunpack.c.l.b16 %v87
    %v162 = vunpack.c.l.b16 %v88
    %v163 = vunpack.c.l.b16 %v89
    %v164 = vunpack.c.l.b16 %v90
    %v165 = vunpack.c.l.b16 %v91
    %v166 = vunpack.c.l.b16 %v92
    %v167 = vunpack.c.l.b16 %v93
    %v168 = vunpack.c.l.b16 %v94
    %v169 = vunpack.c.l.b16 %v95
    %v170 = vunpack.c.l.b16 %v96
    %v171 = vunpack.c.l.b16 %v97
    %v172 = vunpack.c.l.b16 %v98
    %v173 = vunpack.c.l.b16 %v99
    %v174 = vunpack.c.l.b16 %v100
    %v175 = vunpack.c.l.b16 %v101
    %v176 = vunpack.c.l.b16 %v102
    %v177 = vunpack.c.l.b16 %v103
    %v178 = vunpack.c.l.b16 %v104
    %v179 = vunpack.c.l.b16 %v105
    %v180 = vpack.c.b16 %v149, %v148
    %v181 = vpack.c.b16 %v151, %v150
    %v182 = vpack.c.b16 %v153, %v152
    %v183 = vpack.c.b16 %v155, %v154
    %v184 = vpack.c.b16 %v157, %v156
    %v185 = vpack.c.b16 %v159, %v158
    %v186 = vpack.c.b16 %v161, %v160
    %v187 = vpack.c.b16 %v163, %v162
    %v188 = vpack.c.b16 %v165, %v164
    %v189 = vpack.c.b16 %v167, %v166
    %v190 = vpack.c.b16 %v169, %v168
    %v191 = vpack.c.b16 %v171, %v170
    %v192 = vpack.c.b16 %v173, %v172
    %v193 = vpack.c.b16 %v175, %v174
    %v194 = vpack.c.b16 %v177, %v176
    %v195 = vpack.c.b16 %v179, %v178
    %212 = vmatprep.subr.bf16.mxu0 0
    %213 = vmatpush1.bf16.msra.mxu0 %v180
    %214 = vmatprep.subr.bf16.mxu0 0
    %215 = vmatpush1.bf16.msra.mxu0 %v181
    %216 = vmatprep.subr.bf16.mxu0 0
    %217 = vmatpush1.bf16.msra.mxu0 %v182
    %218 = vmatprep.subr.bf16.mxu0 0
    %219 = vmatpush1.bf16.msra.mxu0 %v183
    %220 = vmatprep.subr.bf16.mxu0 0
    %221 = vmatpush1.bf16.msra.mxu0 %v184
    %222 = vmatprep.subr.bf16.mxu0 0
    %223 = vmatpush1.bf16.msra.mxu0 %v185
    %224 = vmatprep.subr.bf16.mxu0 0
    %225 = vmatpush1.bf16.msra.mxu0 %v186
    %226 = vmatprep.subr.bf16.mxu0 0
    %227 = vmatpush1.bf16.msra.mxu0 %v187
    %228 = vmatprep.subr.bf16.mxu0 0
    %229 = vmatpush1.bf16.msra.mxu0 %v188
    %230 = vmatprep.subr.bf16.mxu0 0
    %231 = vmatpush1.bf16.msra.mxu0 %v189
    %232 = vmatprep.subr.bf16.mxu0 0
    %233 = vmatpush1.bf16.msra.mxu0 %v190
    %234 = vmatprep.subr.bf16.mxu0 0
    %235 = vmatpush1.bf16.msra.mxu0 %v191
    %236 = vmatprep.subr.bf16.mxu0 0
    %237 = vmatpush1.bf16.msra.mxu0 %v192
    %238 = vmatprep.subr.bf16.mxu0 0
    %239 = vmatpush1.bf16.msra.mxu0 %v193
    %240 = vmatprep.subr.bf16.mxu0 0
    %241 = vmatpush1.bf16.msra.mxu0 %v194
    %242 = vmatprep.subr.bf16.mxu0 0
    %243 = vmatpush1.bf16.msra.mxu0 %v195
    %244 = vmatprep.mubr.bf16.mxu0 %v113
    %245 = vmatmul.mubr.bf16.gmra.mrb[0].mxu0 %v112
    %v246 = vpop.f32.mrb[0].mxu0
    %v247 = vadd.f32 0.0, %v246
    %v248 = vpop.f32.mrb[0].mxu0
    %v249 = vpop.f32.mrb[0].mxu0
    %v250 = vadd.f32 0.0, %v249
    %v251 = vpop.f32.mrb[0].mxu0
    %252 = vdwg.mxu0
    %254 = vset.pattern.permute.xlu0 0
    %255 = vperm.xlu0 %254, %v69
    %v256 = vpop.permute.xlu0 %255
    %259 = vset.pattern.permute.xlu0 0
    %260 = vperm.xlu0 %259, %v70
    %v261 = vpop.permute.xlu0 %260
    %v263 = vmul.f32 %v256, %v247
    %v264 = vmul.f32 %v261, %v250
    %265 = vset.pattern.permute.xlu0 1
    %266 = vperm.xlu0 %265, %v69
    %v267 = vpop.permute.xlu0 %266
    %269 = vset.pattern.permute.xlu0 1
    %270 = vperm.xlu0 %269, %v70
    %v271 = vpop.permute.xlu0 %270
    %v273 = vlaneseq
    %v274 = vshrl.u32 %v273, 7
    %v275 = vsub.s32 0, %v274
    %v276 = vrot.slane %v71, %v275
    %v277 = vmul.f32 %v267, %v276
    %v278 = vmul.f32 %v271, %v276
    %v279 = vadd.f32 %v263, %v277
    %v280 = vadd.f32 %v264, %v278
    %v281 = vlaneseq
    %v282 = vshrl.u32 %v281, 7
    %v283 = vsub.s32 1, %v282
    %v284 = vrot.slane %v71, %v283
    %v285 = vadd.f32 %v279, %v284
    %v286 = vadd.f32 %v280, %v284
    %287 = vset.pattern.permute.xlu0 2
    %288 = vperm.xlu0 %287, %v69
    %v289 = vpop.permute.xlu0 %288
    %291 = vset.pattern.permute.xlu0 2
    %292 = vperm.xlu0 %291, %v70
    %v293 = vpop.permute.xlu0 %292
    %v295 = vmul.f32 %v289, %v285
    %v296 = vmul.f32 %v293, %v286
    %297 = vset.pattern.permute.xlu0 3
    %298 = vperm.xlu0 %297, %v69
    %v299 = vpop.permute.xlu0 %298
    %301 = vset.pattern.permute.xlu0 3
    %302 = vperm.xlu0 %301, %v70
    %v303 = vpop.permute.xlu0 %302
    %v305 = vadd.f32 %v295, %v299
    %v306 = vadd.f32 %v296, %v303
    %v307 = vmax.f32 %v305, 0.0
    %v308 = vmax.f32 %v306, 0.0
    %v309 = vpack.c.bf16 %v308, %v307
    %v310 = vld [vmem:[#allocation5] sm:$0xf]
    %v311 = vld [vmem:[#allocation5 + $0x4] sm:$0xf]
    %v312 = vld [vmem:[#allocation5 + $0x8] sm:$0xf]
    %v313 = vld [vmem:[#allocation5 + $0xc] sm:$0xf]
    %v314 = vld [vmem:[#allocation5 + $0x10] sm:$0xf]
    %v315 = vld [vmem:[#allocation5 + $0x14] sm:$0xf]
    %v316 = vld [vmem:[#allocation5 + $0x18] sm:$0xf]
    %v317 = vld [vmem:[#allocation5 + $0x1c] sm:$0xf]
    %v318 = vld [vmem:[#allocation5 + $0x20] sm:$0xf]
    %v319 = vld [vmem:[#allocation5 + $0x24] sm:$0xf]
    %v320 = vld [vmem:[#allocation5 + $0x28] sm:$0xf]
    %v321 = vld [vmem:[#allocation5 + $0x2c] sm:$0xf]
    %v322 = vld [vmem:[#allocation5 + $0x30] sm:$0xf]
    %v323 = vld [vmem:[#allocation5 + $0x34] sm:$0xf]
    %v324 = vld [vmem:[#allocation5 + $0x38] sm:$0xf]
    %v325 = vld [vmem:[#allocation5 + $0x3c] sm:$0xf]
    %v326 = vld [vmem:[%s1] sm:$0xf]
    %v327 = vld [vmem:[%s1 + $0x4] sm:$0xf]
    %v328 = vld [vmem:[#allocation7] sm:$0xf]
    %v329 = vld [vmem:[#allocation7 + $0x4] sm:$0xf]
    %v330 = vld [vmem:[#allocation7 + $0x8] sm:$0xf]
    %v331 = vld [vmem:[#allocation7 + $0xc] sm:$0xf]
    %v332 = vld [vmem:[#allocation7 + $0x10] sm:$0xf]
    %v333 = vld [vmem:[#allocation7 + $0x14] sm:$0xf]
    %v334 = vld [vmem:[#allocation7 + $0x18] sm:$0xf]
    %v335 = vld [vmem:[#allocation7 + $0x1c] sm:$0xf]
    %v336 = vld [vmem:[#allocation7 + $0x20] sm:$0xf]
    %v337 = vld [vmem:[#allocation7 + $0x24] sm:$0xf]
    %v338 = vld [vmem:[#allocation7 + $0x28] sm:$0xf]
    %v339 = vld [vmem:[#allocation7 + $0x2c] sm:$0xf]
    %v340 = vld [vmem:[#allocation7 + $0x30] sm:$0xf]
    %v341 = vld [vmem:[#allocation7 + $0x34] sm:$0xf]
    %v342 = vld [vmem:[#allocation7 + $0x38] sm:$0xf]
    %v343 = vld [vmem:[#allocation7 + $0x3c] sm:$0xf]
    %v346 = vunpack.c.l.b16 %v326
    %v347 = vunpack.c.l.b16 %v327
    %v348 = vpack.c.b16 %v347, %v346
    %v366 = vunpack.c.l.b16 %v328
    %v367 = vunpack.c.l.b16 %v329
    %v368 = vunpack.c.l.b16 %v330
    %v369 = vunpack.c.l.b16 %v331
    %v370 = vunpack.c.l.b16 %v332
    %v371 = vunpack.c.l.b16 %v333
    %v372 = vunpack.c.l.b16 %v334
    %v373 = vunpack.c.l.b16 %v335
    %v374 = vunpack.c.l.b16 %v336
    %v375 = vunpack.c.l.b16 %v337
    %v376 = vunpack.c.l.b16 %v338
    %v377 = vunpack.c.l.b16 %v339
    %v378 = vunpack.c.l.b16 %v340
    %v379 = vunpack.c.l.b16 %v341
    %v380 = vunpack.c.l.b16 %v342
    %v381 = vunpack.c.l.b16 %v343
    %v382 = vpack.c.b16 %v367, %v366
    %v383 = vpack.c.b16 %v369, %v368
    %v384 = vpack.c.b16 %v371, %v370
    %v385 = vpack.c.b16 %v373, %v372
    %v386 = vpack.c.b16 %v375, %v374
    %v387 = vpack.c.b16 %v377, %v376
    %v388 = vpack.c.b16 %v379, %v378
    %v389 = vpack.c.b16 %v381, %v380
    %398 = vmatprep.subr.bf16.mxu0 0
    %399 = vmatpush1.bf16.msra.mxu0 %v382
    %400 = vmatprep.subr.bf16.mxu0 0
    %401 = vmatpush1.bf16.msra.mxu0 %v383
    %402 = vmatprep.subr.bf16.mxu0 0
    %403 = vmatpush1.bf16.msra.mxu0 %v384
    %404 = vmatprep.subr.bf16.mxu0 0
    %405 = vmatpush1.bf16.msra.mxu0 %v385
    %406 = vmatprep.subr.bf16.mxu0 0
    %407 = vmatpush1.bf16.msra.mxu0 %v386
    %408 = vmatprep.subr.bf16.mxu0 0
    %409 = vmatpush1.bf16.msra.mxu0 %v387
    %410 = vmatprep.subr.bf16.mxu0 0
    %411 = vmatpush1.bf16.msra.mxu0 %v388
    %412 = vmatprep.subr.bf16.mxu0 0
    %413 = vmatpush1.bf16.msra.mxu0 %v389
    %414 = vmatprep.subr.bf16.mxu0 0
    %415 = vmatpush1.bf16.msra.mxu0 0
    %416 = vmatprep.subr.bf16.mxu0 0
    %417 = vmatpush1.bf16.msra.mxu0 0
    %418 = vmatprep.subr.bf16.mxu0 0
    %419 = vmatpush1.bf16.msra.mxu0 0
    %420 = vmatprep.subr.bf16.mxu0 0
    %421 = vmatpush1.bf16.msra.mxu0 0
    %422 = vmatprep.subr.bf16.mxu0 0
    %423 = vmatpush1.bf16.msra.mxu0 0
    %424 = vmatprep.subr.bf16.mxu0 0
    %425 = vmatpush1.bf16.msra.mxu0 0
    %426 = vmatprep.subr.bf16.mxu0 0
    %427 = vmatpush1.bf16.msra.mxu0 0
    %428 = vmatprep.subr.bf16.mxu0 0
    %429 = vmatpush1.bf16.msra.mxu0 0
    %430 = vmatprep.mubr.bf16.mxu0 0
    %431 = vmatmul.mubr.bf16.gmra.mrb[0].mxu0 %v348
    %v432 = vpop.f32.mrb[0].mxu0
    %v433 = vadd.f32 0.0, %v432
    %v434 = vpop.f32.mrb[0].mxu0
    %v435 = vpop.f32.mrb[0].mxu0
    %v436 = vadd.f32 0.0, %v435
    %v437 = vpop.f32.mrb[0].mxu0
    %438 = vdwg.mxu0
    %v455 = vunpack.c.l.b16 %v310
    %v456 = vunpack.c.l.b16 %v311
    %v457 = vunpack.c.l.b16 %v312
    %v458 = vunpack.c.l.b16 %v313
    %v459 = vunpack.c.l.b16 %v314
    %v460 = vunpack.c.l.b16 %v315
    %v461 = vunpack.c.l.b16 %v316
    %v462 = vunpack.c.l.b16 %v317
    %v463 = vunpack.c.l.b16 %v318
    %v464 = vunpack.c.l.b16 %v319
    %v465 = vunpack.c.l.b16 %v320
    %v466 = vunpack.c.l.b16 %v321
    %v467 = vunpack.c.l.b16 %v322
    %v468 = vunpack.c.l.b16 %v323
    %v469 = vunpack.c.l.b16 %v324
    %v470 = vunpack.c.l.b16 %v325
    %v471 = vpack.c.b16 %v456, %v455
    %v472 = vpack.c.b16 %v458, %v457
    %v473 = vpack.c.b16 %v460, %v459
    %v474 = vpack.c.b16 %v462, %v461
    %v475 = vpack.c.b16 %v464, %v463
    %v476 = vpack.c.b16 %v466, %v465
    %v477 = vpack.c.b16 %v468, %v467
    %v478 = vpack.c.b16 %v470, %v469
    %487 = vmatprep.subr.bf16.mxu0 0
    %488 = vmatpush1.bf16.msra.mxu0 %v471
    %489 = vmatprep.subr.bf16.mxu0 0
    %490 = vmatpush1.bf16.msra.mxu0 %v472
    %491 = vmatprep.subr.bf16.mxu0 0
    %492 = vmatpush1.bf16.msra.mxu0 %v473
    %493 = vmatprep.subr.bf16.mxu0 0
    %494 = vmatpush1.bf16.msra.mxu0 %v474
    %495 = vmatprep.subr.bf16.mxu0 0
    %496 = vmatpush1.bf16.msra.mxu0 %v475
    %497 = vmatprep.subr.bf16.mxu0 0
    %498 = vmatpush1.bf16.msra.mxu0 %v476
    %499 = vmatprep.subr.bf16.mxu0 0
    %500 = vmatpush1.bf16.msra.mxu0 %v477
    %501 = vmatprep.subr.bf16.mxu0 0
    %502 = vmatpush1.bf16.msra.mxu0 %v478
    %503 = vmatprep.subr.bf16.mxu0 0
    %504 = vmatpush1.bf16.msra.mxu0 0
    %505 = vmatprep.subr.bf16.mxu0 0
    %506 = vmatpush1.bf16.msra.mxu0 0
    %507 = vmatprep.subr.bf16.mxu0 0
    %508 = vmatpush1.bf16.msra.mxu0 0
    %509 = vmatprep.subr.bf16.mxu0 0
    %510 = vmatpush1.bf16.msra.mxu0 0
    %511 = vmatprep.subr.bf16.mxu0 0
    %512 = vmatpush1.bf16.msra.mxu0 0
    %513 = vmatprep.subr.bf16.mxu0 0
    %514 = vmatpush1.bf16.msra.mxu0 0
    %515 = vmatprep.subr.bf16.mxu0 0
    %516 = vmatpush1.bf16.msra.mxu0 0
    %517 = vmatprep.subr.bf16.mxu0 0
    %518 = vmatpush1.bf16.msra.mxu0 0
    %519 = vmatprep.mubr.bf16.mxu0 0
    %520 = vmatmul.mubr.bf16.gmra.mrb[0].mxu0 %v309
    %v521 = vpop.f32.mrb[0].mxu0
    %v522 = vadd.f32 %v433, %v521
    %v523 = vpop.f32.mrb[0].mxu0
    %v524 = vpop.f32.mrb[0].mxu0
    %v525 = vadd.f32 %v436, %v524
    %v526 = vpop.f32.mrb[0].mxu0
    %527 = vdwg.mxu0
    %v528 = vlaneseq
    %v529 = vshrl.u32 %v528, 7
    %v530 = vsub.s32 2, %v529
    %v531 = vrot.slane %v71, %v530
    %v532 = vadd.f32 %v522, %v531
    %v533 = vadd.f32 %v525, %v531
    %534 = vset.pattern.permute.xlu0 4
    %535 = vperm.xlu0 %534, %v69
    %v536 = vpop.permute.xlu0 %535
    %538 = vset.pattern.permute.xlu0 4
    %539 = vperm.xlu0 %538, %v70
    %v540 = vpop.permute.xlu0 %539
    %v542 = vmul.f32 %v536, %v532
    %v543 = vmul.f32 %v540, %v533
    %544 = vset.pattern.permute.xlu0 5
    %545 = vperm.xlu0 %544, %v69
    %v546 = vpop.permute.xlu0 %545
    %548 = vset.pattern.permute.xlu0 5
    %549 = vperm.xlu0 %548, %v70
    %v550 = vpop.permute.xlu0 %549
    %v552 = vadd.f32 %v542, %v546
    %v553 = vadd.f32 %v543, %v550
    %v554 = vmax.f32 %v552, 0.0
    %v555 = vmax.f32 %v553, 0.0
    %v556 = vpack.c.bf16 %v555, %v554
    %v558 = vunpack.c.l.b16 %v556
    %v559 = vunpack.c.h.b16 %v556
    %v560 = vpack.c.b16 %v558, %v558
    %v561 = vpack.c.b16 %v559, %v559
    %564 = vst [vmem:[#allocation8] sm:$0xf] %v560
    %565 = vst [vmem:[#allocation8 + $0x4] sm:$0xf] %v561
    // Predicated region
    $region42: #{tpu_custom_call.1} parent=1 // pred_check
      _
    $region43: #{tpu_custom_call.1} parent=1 // pred_check_branch
      %567 = sbr.rel (0) target = $region45
    $region44: #{tpu_custom_call.1} parent=1 // pred_region
      %s569 = ssub.s32 128, 128
      %570 = vsyncadd [#allocation4], %s569
      %s571 = sshll.u32 [#allocation8], 4
      %s572 = int_to_ptr.vmem [resolvable:$true] %s571
      %577 = dma.vmem_to_hbm [thread:$0]  %s572, 128, %s7, [#allocation4], 64, 64, 4
    $region45: #{tpu_custom_call.1} parent=1 // pred_fallthru
      _
    // Predicated region
    $region46: #{tpu_custom_call.1} parent=1 // pred_check
      _
    $region47: #{tpu_custom_call.1} parent=1 // pred_check_branch
      %579 = sbr.rel (0) target = $region49
    $region48: #{tpu_custom_call.1} parent=1 // pred_region
      %580 = dma.done [#allocation4], 128
    $region49: #{tpu_custom_call.1} parent=1 // pred_fallthru
      _
    %581 = vsyncpa [#allocation3], 1
    %582 = vsyncpa [#allocation6], 1
    %583 = vsyncpa [#allocation4], 1

</llo_original>
